<compile_context>
chip_gen: v7x
topology: tpu7x:2x2x1
jax: 0.10.0
libtpu: 0.0.40
codegen_flags: <defaults>
</compile_context>

<pallas_src>
import jax
import jax.numpy as jnp
from jax.experimental import pallas as pl
from jax.experimental.pallas import tpu as pltpu

MAX_TB = 1024     # batch-tile cap: ~3 MiB f32 x-tile per buffer, well under VMEM
OUT_PAD = 128     # lane-dense padded logits width (true logits = first 10 cols)

D_IN, D_H1, D_H2, D_OUT = 784, 128, 256, 10


def _round_up(n, m):
    return ((n + m - 1) // m) * m


def _mlp_kernel(x_ref, w1_ref, b1_ref, w2_ref, b2_ref, w3_ref, b3_ref, o_ref):
    # Cast f32 activations to bf16 on the VPU (free: VALU slack under DMA time).
    x = x_ref[...].astype(jnp.bfloat16)
    # hidden1 + ReLU : (TB,784)bf16 @ (784,128)bf16 -> f32 accumulate
    h1 = jnp.dot(x, w1_ref[...], preferred_element_type=jnp.float32)
    h1 = jnp.maximum(h1 + b1_ref[...], 0.0)
    # dropout (eval mode) == identity
    # hidden2 + ReLU : (TB,128)bf16 @ (128,256)bf16 -> f32 accumulate
    h2 = jnp.dot(h1.astype(jnp.bfloat16), w2_ref[...],
                 preferred_element_type=jnp.float32)
    h2 = jnp.maximum(h2 + b2_ref[...], 0.0)
    # dropout (eval mode) == identity
    # out : (TB,256)bf16 @ (256,128 zero-padded)bf16 -> f32, lane-dense bf16 store
    logits = jnp.dot(h2.astype(jnp.bfloat16), w3_ref[...],
                     preferred_element_type=jnp.float32)
    o_ref[...] = (logits + b3_ref[...]).astype(o_ref.dtype)


def prepare_params(w1, b1, w2, b2, w3, b3):
    """One-time weight preprocessing (hoisted out of the per-call forward).
    Weights stored as (in, out); biases as (1, out)."""
    w1b = w1.astype(jnp.bfloat16)
    w2b = w2.astype(jnp.bfloat16)
    # Pad the final layer to a lane-dense 128-wide output (zeros in cols 10..127).
    w3p = jnp.zeros((w3.shape[0], OUT_PAD), jnp.bfloat16)
    w3p = w3p.at[:, : w3.shape[1]].set(w3.astype(jnp.bfloat16))
    b3p = jnp.zeros((1, OUT_PAD), jnp.float32)
    b3p = b3p.at[:, : b3.shape[1]].set(b3)
    return w1b, b1, w2b, b2, w3p, b3p


def mnist_nn_forward(x, w1b, b1, w2b, b2, w3p, b3p):
    """x: (B, 784) f32. Prepared params from prepare_params().
    Returns (B, 10) f32 logits."""
    B = x.shape[0]
    # Adaptive tile: small batches don't pad up to a huge tile; large batches
    # get big tiles (and >= 2 tiles for v7x's two TensorCores once B > MAX_TB).
    TB = MAX_TB if B > MAX_TB else _round_up(B, 16)   # 16 = bf16 sublane pack
    n_tiles = pl.cdiv(B, TB)

    flops = 2 * B * (D_IN * D_H1 + D_H1 * D_H2 + D_H2 * OUT_PAD)
    bytes_accessed = (
        B * D_IN * 4                                    # f32 activations in
        + (w1b.size + w2b.size + w3p.size) * 2          # bf16 weights
        + (b1.size + b2.size + b3p.size) * 4            # f32 biases
        + B * OUT_PAD * 2                               # bf16 padded logits out
    )

    const = lambda i: (0, 0)   # weights/biases: same block every grid step
    out = pl.pallas_call(
        _mlp_kernel,
        out_shape=jax.ShapeDtypeStruct((B, OUT_PAD), jnp.bfloat16),
        grid=(n_tiles,),
        in_specs=[
            pl.BlockSpec((TB, D_IN), lambda i: (i, 0)),    # x batch tile (f32)
            pl.BlockSpec((D_IN, D_H1), const),             # w1
            pl.BlockSpec((1, D_H1), const),                # b1
            pl.BlockSpec((D_H1, D_H2), const),             # w2
            pl.BlockSpec((1, D_H2), const),                # b2
            pl.BlockSpec((D_H2, OUT_PAD), const),          # w3 (padded)
            pl.BlockSpec((1, OUT_PAD), const),             # b3 (padded)
        ],
        out_specs=pl.BlockSpec((TB, OUT_PAD), lambda i: (i, 0)),
        compiler_params=pltpu.CompilerParams(
            dimension_semantics=("parallel",),
            vmem_limit_bytes=32 * 1024 * 1024,
        ),
        cost_estimate=pl.CostEstimate(
            flops=flops, transcendentals=0, bytes_accessed=bytes_accessed),
    )(x, w1b, b1, w2b, b2, w3p, b3p)

    return out[:, :D_OUT].astype(jnp.float32)


def init_params(key):
    """Deterministic synthetic params with the same shapes as the PyTorch module.
    Weights stored as (in_features, out_features); biases as (1, out_features)."""
    k1, k2, k3, k4, k5, k6 = jax.random.split(key, 6)

    def linear(kw, kb, fan_in, fan_out):
        bound = 1.0 / jnp.sqrt(fan_in)
        w = jax.random.uniform(kw, (fan_in, fan_out), jnp.float32, -bound, bound)
        b = jax.random.uniform(kb, (1, fan_out), jnp.float32, -bound, bound)
        return w, b

    w1, b1 = linear(k1, k2, D_IN, D_H1)
    w2, b2 = linear(k3, k4, D_H1, D_H2)
    w3, b3 = linear(k5, k6, D_H2, D_OUT)
    return w1, b1, w2, b2, w3, b3


if __name__ == "__main__":
    key = jax.random.PRNGKey(0)
    kx, kp = jax.random.split(key)

    B = 8  # small batch; adaptive TB means only 8 padded rows in the tile
    x = jax.random.normal(kx, (B, D_IN), jnp.float32)
    w1, b1, w2, b2, w3, b3 = init_params(kp)

    prepared = prepare_params(w1, b1, w2, b2, w3, b3)   # one-time setup
    forward = jax.jit(mnist_nn_forward)

    out = forward(x, *prepared)
    out = jax.block_until_ready(out)

    # Reference with the same bf16-input / f32-accumulate arithmetic.
    ref = jnp.maximum(
        jnp.dot(x.astype(jnp.bfloat16), w1.astype(jnp.bfloat16),
                preferred_element_type=jnp.float32) + b1, 0.0)
    ref = jnp.maximum(
        jnp.dot(ref.astype(jnp.bfloat16), w2.astype(jnp.bfloat16),
                preferred_element_type=jnp.float32) + b2, 0.0)
    ref = jnp.dot(ref.astype(jnp.bfloat16), w3.astype(jnp.bfloat16),
                  preferred_element_type=jnp.float32) + b3

    assert out.shape == (B, D_OUT)
    # bf16 output store contributes ~4e-3 extra rounding on O(1) logits.
    assert jnp.allclose(out, ref, atol=2e-2, rtol=2e-2), (
        float(jnp.max(jnp.abs(out - ref))))

    print("KERNEL_OK")
</pallas_src>

<mosaic_0001>
module attributes {stable_mosaic.version = 11 : i64} {
  func.func @_mlp_kernel(%arg0: i32, %arg1: memref<16x784xf32, #tpu.memory_space<vmem>>, %arg2: memref<784x128xbf16, #tpu.memory_space<vmem>>, %arg3: memref<1x128xf32, #tpu.memory_space<vmem>>, %arg4: memref<128x256xbf16, #tpu.memory_space<vmem>>, %arg5: memref<1x256xf32, #tpu.memory_space<vmem>>, %arg6: memref<256x128xbf16, #tpu.memory_space<vmem>>, %arg7: memref<1x128xf32, #tpu.memory_space<vmem>>, %arg8: memref<16x128xbf16, #tpu.memory_space<vmem>>) attributes {dimension_semantics = [#tpu.dimension_semantics<parallel>], iteration_bounds = array<i64: 1>, scalar_prefetch = 0 : i64, scratch_operands = 0 : i64, tpu.core_type = #tpu.core_type<tc>, window_params = [{transform_indices = @transform_0, window_bounds = array<i64: 16, 784>}, {pipeline_mode = #tpu.pipeline_mode<synchronous>, transform_indices = @transform_1, window_bounds = array<i64: 784, 128>}, {pipeline_mode = #tpu.pipeline_mode<synchronous>, transform_indices = @transform_2, window_bounds = array<i64: 1, 128>}, {pipeline_mode = #tpu.pipeline_mode<synchronous>, transform_indices = @transform_3, window_bounds = array<i64: 128, 256>}, {pipeline_mode = #tpu.pipeline_mode<synchronous>, transform_indices = @transform_4, window_bounds = array<i64: 1, 256>}, {pipeline_mode = #tpu.pipeline_mode<synchronous>, transform_indices = @transform_5, window_bounds = array<i64: 256, 128>}, {pipeline_mode = #tpu.pipeline_mode<synchronous>, transform_indices = @transform_6, window_bounds = array<i64: 1, 128>}, {transform_indices = @transform_7, window_bounds = array<i64: 16, 128>}]} {
    %c0 = arith.constant 0 : index
    %c0_0 = arith.constant 0 : index
    %0 = vector.load %arg1[%c0, %c0_0] : memref<16x784xf32, #tpu.memory_space<vmem>>, vector<16x784xf32>
    %1 = arith.truncf %0 : vector<16x784xf32> to vector<16x784xbf16>
    %c0_1 = arith.constant 0 : index
    %c0_2 = arith.constant 0 : index
    %2 = vector.load %arg2[%c0_1, %c0_2] : memref<784x128xbf16, #tpu.memory_space<vmem>>, vector<784x128xbf16>
    %cst = arith.constant dense<0.000000e+00> : vector<16x128xf32>
    %3 = tpu.matmul %1, %2, %cst {dimension_numbers = #tpu.dot_dimension_numbers<[1], [0], [0], [1], [0, 0, 1, 1], [], []>} : vector<16x784xbf16>, vector<784x128xbf16>, vector<16x128xf32> -> vector<16x128xf32>
    %c0_3 = arith.constant 0 : index
    %c0_4 = arith.constant 0 : index
    %4 = vector.load %arg3[%c0_3, %c0_4] : memref<1x128xf32, #tpu.memory_space<vmem>>, vector<1x128xf32>
    %5 = vector.broadcast %4 : vector<1x128xf32> to vector<16x128xf32>
    %6 = arith.addf %3, %5 : vector<16x128xf32>
    %cst_5 = arith.constant 0.000000e+00 : f32
    %7 = vector.broadcast %cst_5 : f32 to vector<16x128xf32>
    %8 = arith.maximumf %6, %7 : vector<16x128xf32>
    %9 = arith.truncf %8 : vector<16x128xf32> to vector<16x128xbf16>
    %c0_6 = arith.constant 0 : index
    %c0_7 = arith.constant 0 : index
    %10 = vector.load %arg4[%c0_6, %c0_7] : memref<128x256xbf16, #tpu.memory_space<vmem>>, vector<128x256xbf16>
    %cst_8 = arith.constant dense<0.000000e+00> : vector<16x256xf32>
    %11 = tpu.matmul %9, %10, %cst_8 {dimension_numbers = #tpu.dot_dimension_numbers<[1], [0], [0], [1], [0, 0, 1, 1], [], []>} : vector<16x128xbf16>, vector<128x256xbf16>, vector<16x256xf32> -> vector<16x256xf32>
    %c0_9 = arith.constant 0 : index
    %c0_10 = arith.constant 0 : index
    %12 = vector.load %arg5[%c0_9, %c0_10] : memref<1x256xf32, #tpu.memory_space<vmem>>, vector<1x256xf32>
    %13 = vector.broadcast %12 : vector<1x256xf32> to vector<16x256xf32>
    %14 = arith.addf %11, %13 : vector<16x256xf32>
    %cst_11 = arith.constant 0.000000e+00 : f32
    %15 = vector.broadcast %cst_11 : f32 to vector<16x256xf32>
    %16 = arith.maximumf %14, %15 : vector<16x256xf32>
    %17 = arith.truncf %16 : vector<16x256xf32> to vector<16x256xbf16>
    %c0_12 = arith.constant 0 : index
    %c0_13 = arith.constant 0 : index
    %18 = vector.load %arg6[%c0_12, %c0_13] : memref<256x128xbf16, #tpu.memory_space<vmem>>, vector<256x128xbf16>
    %cst_14 = arith.constant dense<0.000000e+00> : vector<16x128xf32>
    %19 = tpu.matmul %17, %18, %cst_14 {dimension_numbers = #tpu.dot_dimension_numbers<[1], [0], [0], [1], [0, 0, 1, 1], [], []>} : vector<16x256xbf16>, vector<256x128xbf16>, vector<16x128xf32> -> vector<16x128xf32>
    %c0_15 = arith.constant 0 : index
    %c0_16 = arith.constant 0 : index
    %20 = vector.load %arg7[%c0_15, %c0_16] : memref<1x128xf32, #tpu.memory_space<vmem>>, vector<1x128xf32>
    %21 = vector.broadcast %20 : vector<1x128xf32> to vector<16x128xf32>
    %22 = arith.addf %19, %21 : vector<16x128xf32>
    %23 = arith.truncf %22 : vector<16x128xf32> to vector<16x128xbf16>
    %c0_17 = arith.constant 0 : index
    %c0_18 = arith.constant 0 : index
    %24 = vector.load %arg8[%c0_17, %c0_18] : memref<16x128xbf16, #tpu.memory_space<vmem>>, vector<16x128xbf16>
    tpu.vector_store %arg8[%c0_17, %c0_18], %23 {strides = array<i32>} : memref<16x128xbf16, #tpu.memory_space<vmem>>, vector<16x128xbf16>,
    return
  }
  func.func @transform_0(%arg0: i32) -> (i32, i32) {
    %c0_i32 = arith.constant 0 : i32
    %c0_i32_0 = arith.constant 0 : i32
    return %arg0, %c0_i32 : i32, i32
  }
  func.func @transform_1(%arg0: i32) -> (i32, i32) {
    %c0_i32 = arith.constant 0 : i32
    %c0_i32_0 = arith.constant 0 : i32
    %c0_i32_1 = arith.constant 0 : i32
    return %c0_i32, %c0_i32_0 : i32, i32
  }
  func.func @transform_2(%arg0: i32) -> (i32, i32) {
    %c0_i32 = arith.constant 0 : i32
    %c0_i32_0 = arith.constant 0 : i32
    %c0_i32_1 = arith.constant 0 : i32
    return %c0_i32, %c0_i32_0 : i32, i32
  }
  func.func @transform_3(%arg0: i32) -> (i32, i32) {
    %c0_i32 = arith.constant 0 : i32
    %c0_i32_0 = arith.constant 0 : i32
    %c0_i32_1 = arith.constant 0 : i32
    return %c0_i32, %c0_i32_0 : i32, i32
  }
  func.func @transform_4(%arg0: i32) -> (i32, i32) {
    %c0_i32 = arith.constant 0 : i32
    %c0_i32_0 = arith.constant 0 : i32
    %c0_i32_1 = arith.constant 0 : i32
    return %c0_i32, %c0_i32_0 : i32, i32
  }
  func.func @transform_5(%arg0: i32) -> (i32, i32) {
    %c0_i32 = arith.constant 0 : i32
    %c0_i32_0 = arith.constant 0 : i32
    %c0_i32_1 = arith.constant 0 : i32
    return %c0_i32, %c0_i32_0 : i32, i32
  }
  func.func @transform_6(%arg0: i32) -> (i32, i32) {
    %c0_i32 = arith.constant 0 : i32
    %c0_i32_0 = arith.constant 0 : i32
    %c0_i32_1 = arith.constant 0 : i32
    return %c0_i32, %c0_i32_0 : i32, i32
  }
  func.func @transform_7(%arg0: i32) -> (i32, i32) {
    %c0_i32 = arith.constant 0 : i32
    %c0_i32_0 = arith.constant 0 : i32
    return %arg0, %c0_i32 : i32, i32
  }
}

</mosaic_0001>

<llo_original>
// kernel: mnist_nn_forward.1
$region0: #{mnist_nn_forward.1}
  #allocation0 [shape = 'u32[]', space=smem, size = 0x4, offset = 0x4, fixed_abs, tag = 'smem constant byte address 0x4 - core index']
  #allocation1 [shape = 'u32[144,128]{1,0:T(1,128)}', space=vmem, size = 0x12000, scoped, tag = 'internal scratch']
  %s0 = inlined_call_operand.hbm [shape: f32[8,784], index: 0, kind: input, shape index: {}]
  %s1 = inlined_call_operand.hbm [shape: bf16[784,128], index: 1, kind: input, shape index: {}]
  %s2 = inlined_call_operand.vmem [shape: f32[1,128], index: 2, kind: input, shape index: {}]
  %s3 = inlined_call_operand.hbm [shape: bf16[128,256], index: 3, kind: input, shape index: {}]
  %s4 = inlined_call_operand.vmem [shape: f32[1,256], index: 4, kind: input, shape index: {}]
  %s5 = inlined_call_operand.hbm [shape: bf16[256,128], index: 5, kind: input, shape index: {}]
  %s6 = inlined_call_operand.vmem [shape: f32[1,128], index: 6, kind: input, shape index: {}]
  %s7 = inlined_call_operand.vmem [shape: bf16[8,128], index: 7, kind: output, shape index: {}]
  %s8 = sld [smem:[#allocation0]]
  $region84: #{mnist_nn_forward.1} parent=0
    _
  %s10 = ssub.s32 1, %s8
  %s11 = scalar_select 0, %s10, %s8
  $region1: #{mnist_nn_forward.1} parent=0
    #allocation2 [shape = 'u8[57344]{0}', space=vmem, size = 0xe000, scoped, tag = 'input window, operand 0, single buffered']
    #allocation3 [shape = 's32[1]{0}', space=sflag, size = 0x4, scoped, tag = 'scoped memory for mnist_nn_forward.1']
    #allocation4 [shape = 'u8[200704]{0}', space=vmem, size = 0x31000, scoped, tag = 'input window, operand 1, single buffered']
    #allocation5 [shape = 's32[1]{0}', space=sflag, size = 0x4, scoped, tag = 'scoped memory for mnist_nn_forward.1']
    #allocation6 [shape = 'u8[65536]{0}', space=vmem, size = 0x10000, scoped, tag = 'input window, operand 3, single buffered']
    #allocation7 [shape = 'u8[65536]{0}', space=vmem, size = 0x10000, scoped, tag = 'input window, operand 5, single buffered']
    #allocation8 [shape = 's32[1]{0}', space=sflag, size = 0x4, scoped, tag = 'scoped memory for mnist_nn_forward.1']
    #allocation9 [shape = 'u8[4096]{0}', space=vmem, size = 0x1000, scoped, tag = 'output window, operand 0, single buffered']
    %12 = vsyncpa [#allocation3], 0
    %13 = vsyncpa [#allocation5], 0
    %14 = vsyncpa [#allocation8], 0
    // Predicated region
    $region2: #{mnist_nn_forward.1} parent=1 // pred_check
      _
    $region3: #{mnist_nn_forward.1} parent=1 // pred_check_branch
      %16 = sbr.rel (0) target = $region5
    $region4: #{mnist_nn_forward.1} parent=1 // pred_region
      %s18 = ssub.s32 1792, 896
      %19 = vsyncadd [#allocation3], %s18
      %s20 = sshll.u32 [#allocation2], 4
      %s21 = int_to_ptr.vmem [resolvable:$true] %s20
      %26 = dma.hbm_to_vmem [thread:$0]  %s0, 896, %s21, [#allocation3], 896, 896, 56
    $region5: #{mnist_nn_forward.1} parent=1 // pred_fallthru
      _
    // Predicated region
    $region6: #{mnist_nn_forward.1} parent=1 // pred_check
      _
    $region7: #{mnist_nn_forward.1} parent=1 // pred_check_branch
      %28 = sbr.rel (0) target = $region9
    $region8: #{mnist_nn_forward.1} parent=1 // pred_region
      %s30 = ssub.s32 6272, 6272
      %31 = vsyncadd [#allocation5], %s30
      %s32 = sshll.u32 [#allocation4], 4
      %s33 = int_to_ptr.vmem [resolvable:$true] %s32
      %38 = dma.hbm_to_vmem [thread:$0]  %s1, 6272, %s33, [#allocation5], 64, 64, 4
    $region9: #{mnist_nn_forward.1} parent=1 // pred_fallthru
      _
    // Predicated region
    $region10: #{mnist_nn_forward.1} parent=1 // pred_check
      _
    $region11: #{mnist_nn_forward.1} parent=1 // pred_check_branch
      %40 = sbr.rel (0) target = $region13
    $region12: #{mnist_nn_forward.1} parent=1 // pred_region
      _
    $region13: #{mnist_nn_forward.1} parent=1 // pred_fallthru
      _
    // Predicated region
    $region14: #{mnist_nn_forward.1} parent=1 // pred_check
      _
    $region15: #{mnist_nn_forward.1} parent=1 // pred_check_branch
      %42 = sbr.rel (0) target = $region17
    $region16: #{mnist_nn_forward.1} parent=1 // pred_region
      %s44 = ssub.s32 2048, 2048
      %45 = vsyncadd [#allocation5], %s44
      %s46 = sshll.u32 [#allocation6], 4
      %s47 = int_to_ptr.vmem [resolvable:$true] %s46
      %52 = dma.hbm_to_vmem [thread:$0]  %s3, 2048, %s47, [#allocation5], 128, 128, 8
    $region17: #{mnist_nn_forward.1} parent=1 // pred_fallthru
      _
    // Predicated region
    $region18: #{mnist_nn_forward.1} parent=1 // pred_check
      _
    $region19: #{mnist_nn_forward.1} parent=1 // pred_check_branch
      %54 = sbr.rel (0) target = $region21
    $region20: #{mnist_nn_forward.1} parent=1 // pred_region
      _
    $region21: #{mnist_nn_forward.1} parent=1 // pred_fallthru
      _
    // Predicated region
    $region22: #{mnist_nn_forward.1} parent=1 // pred_check
      _
    $region23: #{mnist_nn_forward.1} parent=1 // pred_check_branch
      %56 = sbr.rel (0) target = $region25
    $region24: #{mnist_nn_forward.1} parent=1 // pred_region
      %s58 = ssub.s32 2048, 2048
      %59 = vsyncadd [#allocation8], %s58
      %s60 = sshll.u32 [#allocation7], 4
      %s61 = int_to_ptr.vmem [resolvable:$true] %s60
      %66 = dma.hbm_to_vmem [thread:$0]  %s5, 2048, %s61, [#allocation8], 64, 64, 4
    $region25: #{mnist_nn_forward.1} parent=1 // pred_fallthru
      _
    // Predicated region
    $region26: #{mnist_nn_forward.1} parent=1 // pred_check
      _
    $region27: #{mnist_nn_forward.1} parent=1 // pred_check_branch
      %68 = sbr.rel (0) target = $region29
    $region28: #{mnist_nn_forward.1} parent=1 // pred_region
      _
    $region29: #{mnist_nn_forward.1} parent=1 // pred_fallthru
      _
    // Predicated region
    $region30: #{mnist_nn_forward.1} parent=1 // pred_check
      _
    $region31: #{mnist_nn_forward.1} parent=1 // pred_check_branch
      %70 = sbr.rel (0) target = $region33
    $region32: #{mnist_nn_forward.1} parent=1 // pred_region
      %71 = dma.done [#allocation3], 1792
    $region33: #{mnist_nn_forward.1} parent=1 // pred_fallthru
      _
    // Predicated region
    $region34: #{mnist_nn_forward.1} parent=1 // pred_check
      _
    $region35: #{mnist_nn_forward.1} parent=1 // pred_check_branch
      %73 = sbr.rel (0) target = $region37
    $region36: #{mnist_nn_forward.1} parent=1 // pred_region
      %74 = dma.done [#allocation5], 6272
    $region37: #{mnist_nn_forward.1} parent=1 // pred_fallthru
      _
    // Predicated region
    $region38: #{mnist_nn_forward.1} parent=1 // pred_check
      _
    $region39: #{mnist_nn_forward.1} parent=1 // pred_check_branch
      %76 = sbr.rel (0) target = $region41
    $region40: #{mnist_nn_forward.1} parent=1 // pred_region
      %77 = dma.done [#allocation5], 2048
    $region41: #{mnist_nn_forward.1} parent=1 // pred_fallthru
      _
    // Predicated region
    $region42: #{mnist_nn_forward.1} parent=1 // pred_check
      _
    $region43: #{mnist_nn_forward.1} parent=1 // pred_check_branch
      %79 = sbr.rel (0) target = $region45
    $region44: #{mnist_nn_forward.1} parent=1 // pred_region
      %80 = dma.done [#allocation8], 2048
    $region45: #{mnist_nn_forward.1} parent=1 // pred_fallthru
      _
    %v82 = vld [vmem:[#allocation2] sm:$0xff]
    %v83 = vld [vmem:[#allocation2 + $0x8] sm:$0xff]
    %v84 = vld [vmem:[#allocation2 + $0x10] sm:$0xff]
    %v85 = vld [vmem:[#allocation2 + $0x18] sm:$0xff]
    %v86 = vld [vmem:[#allocation2 + $0x20] sm:$0xff]
    %v87 = vld [vmem:[#allocation2 + $0x28] sm:$0xff]
    %v88 = vld [vmem:[#allocation2 + $0x30] sm:$0xff]
    %v89 = vld [vmem:[#allocation2 + $0x38] sm:$0xff]
    %v90 = vld [vmem:[#allocation2 + $0x40] sm:$0xff]
    %v91 = vld [vmem:[#allocation2 + $0x48] sm:$0xff]
    %v92 = vld [vmem:[#allocation2 + $0x50] sm:$0xff]
    %v93 = vld [vmem:[#allocation2 + $0x58] sm:$0xff]
    %v94 = vld [vmem:[#allocation2 + $0x60] sm:$0xff]
    %v95 = vld [vmem:[#allocation2 + $0x68] sm:$0xff]
    %v96 = vpack.c.bf16 %v89, %v82
    %v97 = vpack.c.bf16 %v90, %v83
    %v98 = vpack.c.bf16 %v91, %v84
    %v99 = vpack.c.bf16 %v92, %v85
    %v100 = vpack.c.bf16 %v93, %v86
    %v101 = vpack.c.bf16 %v94, %v87
    %v102 = vpack.c.bf16 %v95, %v88
    %v103 = vld [vmem:[#allocation4] sm:$0xf]
    %v104 = vld [vmem:[#allocation4 + $0x4] sm:$0xf]
    %v105 = vld [vmem:[#allocation4 + $0x8] sm:$0xf]
    %v106 = vld [vmem:[#allocation4 + $0xc] sm:$0xf]
    %v107 = vld [vmem:[#allocation4 + $0x10] sm:$0xf]
    %v108 = vld [vmem:[#allocation4 + $0x14] sm:$0xf]
    %v109 = vld [vmem:[#allocation4 + $0x18] sm:$0xf]
    %v110 = vld [vmem:[#allocation4 + $0x1c] sm:$0xf]
    %v111 = vld [vmem:[#allocation4 + $0x20] sm:$0xf]
    %v112 = vld [vmem:[#allocation4 + $0x24] sm:$0xf]
    %v113 = vld [vmem:[#allocation4 + $0x28] sm:$0xf]
    %v114 = vld [vmem:[#allocation4 + $0x2c] sm:$0xf]
    %v115 = vld [vmem:[#allocation4 + $0x30] sm:$0xf]
    %v116 = vld [vmem:[#allocation4 + $0x34] sm:$0xf]
    %v117 = vld [vmem:[#allocation4 + $0x38] sm:$0xf]
    %v118 = vld [vmem:[#allocation4 + $0x3c] sm:$0xf]
    %v119 = vld [vmem:[#allocation4 + $0x40] sm:$0xf]
    %v120 = vld [vmem:[#allocation4 + $0x44] sm:$0xf]
    %v121 = vld [vmem:[#allocation4 + $0x48] sm:$0xf]
    %v122 = vld [vmem:[#allocation4 + $0x4c] sm:$0xf]
    %v123 = vld [vmem:[#allocation4 + $0x50] sm:$0xf]
    %v124 = vld [vmem:[#allocation4 + $0x54] sm:$0xf]
    %v125 = vld [vmem:[#allocation4 + $0x58] sm:$0xf]
    %v126 = vld [vmem:[#allocation4 + $0x5c] sm:$0xf]
    %v127 = vld [vmem:[#allocation4 + $0x60] sm:$0xf]
    %v128 = vld [vmem:[#allocation4 + $0x64] sm:$0xf]
    %v129 = vld [vmem:[#allocation4 + $0x68] sm:$0xf]
    %v130 = vld [vmem:[#allocation4 + $0x6c] sm:$0xf]
    %v131 = vld [vmem:[#allocation4 + $0x70] sm:$0xf]
    %v132 = vld [vmem:[#allocation4 + $0x74] sm:$0xf]
    %v133 = vld [vmem:[#allocation4 + $0x78] sm:$0xf]
    %v134 = vld [vmem:[#allocation4 + $0x7c] sm:$0xf]
    %v135 = vld [vmem:[#allocation4 + $0x80] sm:$0xf]
    %v136 = vld [vmem:[#allocation4 + $0x84] sm:$0xf]
    %v137 = vld [vmem:[#allocation4 + $0x88] sm:$0xf]
    %v138 = vld [vmem:[#allocation4 + $0x8c] sm:$0xf]
    %v139 = vld [vmem:[#allocation4 + $0x90] sm:$0xf]
    %v140 = vld [vmem:[#allocation4 + $0x94] sm:$0xf]
    %v141 = vld [vmem:[#allocation4 + $0x98] sm:$0xf]
    %v142 = vld [vmem:[#allocation4 + $0x9c] sm:$0xf]
    %v143 = vld [vmem:[#allocation4 + $0xa0] sm:$0xf]
    %v144 = vld [vmem:[#allocation4 + $0xa4] sm:$0xf]
    %v145 = vld [vmem:[#allocation4 + $0xa8] sm:$0xf]
    %v146 = vld [vmem:[#allocation4 + $0xac] sm:$0xf]
    %v147 = vld [vmem:[#allocation4 + $0xb0] sm:$0xf]
    %v148 = vld [vmem:[#allocation4 + $0xb4] sm:$0xf]
    %v149 = vld [vmem:[#allocation4 + $0xb8] sm:$0xf]
    %v150 = vld [vmem:[#allocation4 + $0xbc] sm:$0xf]
    %v151 = vld [vmem:[#allocation4 + $0xc0] sm:$0xf]
    %v152 = vld [vmem:[#allocation4 + $0xc4] sm:$0xf]
    %v153 = vld [vmem:[#allocation4 + $0xc8] sm:$0xf]
    %v154 = vld [vmem:[#allocation4 + $0xcc] sm:$0xf]
    %v155 = vld [vmem:[#allocation4 + $0xd0] sm:$0xf]
    %v156 = vld [vmem:[#allocation4 + $0xd4] sm:$0xf]
    %v157 = vld [vmem:[#allocation4 + $0xd8] sm:$0xf]
    %v158 = vld [vmem:[#allocation4 + $0xdc] sm:$0xf]
    %v159 = vld [vmem:[#allocation4 + $0xe0] sm:$0xf]
    %v160 = vld [vmem:[#allocation4 + $0xe4] sm:$0xf]
    %v161 = vld [vmem:[#allocation4 + $0xe8] sm:$0xf]
    %v162 = vld [vmem:[#allocation4 + $0xec] sm:$0xf]
    %v163 = vld [vmem:[#allocation4 + $0xf0] sm:$0xf]
    %v164 = vld [vmem:[#allocation4 + $0xf4] sm:$0xf]
    %v165 = vld [vmem:[#allocation4 + $0xf8] sm:$0xf]
    %v166 = vld [vmem:[#allocation4 + $0xfc] sm:$0xf]
    %v167 = vld [vmem:[#allocation4 + $0x100] sm:$0xf]
    %v168 = vld [vmem:[#allocation4 + $0x104] sm:$0xf]
    %v169 = vld [vmem:[#allocation4 + $0x108] sm:$0xf]
    %v170 = vld [vmem:[#allocation4 + $0x10c] sm:$0xf]
    %v171 = vld [vmem:[#allocation4 + $0x110] sm:$0xf]
    %v172 = vld [vmem:[#allocation4 + $0x114] sm:$0xf]
    %v173 = vld [vmem:[#allocation4 + $0x118] sm:$0xf]
    %v174 = vld [vmem:[#allocation4 + $0x11c] sm:$0xf]
    %v175 = vld [vmem:[#allocation4 + $0x120] sm:$0xf]
    %v176 = vld [vmem:[#allocation4 + $0x124] sm:$0xf]
    %v177 = vld [vmem:[#allocation4 + $0x128] sm:$0xf]
    %v178 = vld [vmem:[#allocation4 + $0x12c] sm:$0xf]
    %v179 = vld [vmem:[#allocation4 + $0x130] sm:$0xf]
    %v180 = vld [vmem:[#allocation4 + $0x134] sm:$0xf]
    %v181 = vld [vmem:[#allocation4 + $0x138] sm:$0xf]
    %v182 = vld [vmem:[#allocation4 + $0x13c] sm:$0xf]
    %v183 = vld [vmem:[#allocation4 + $0x140] sm:$0xf]
    %v184 = vld [vmem:[#allocation4 + $0x144] sm:$0xf]
    %v185 = vld [vmem:[#allocation4 + $0x148] sm:$0xf]
    %v186 = vld [vmem:[#allocation4 + $0x14c] sm:$0xf]
    %v187 = vld [vmem:[#allocation4 + $0x150] sm:$0xf]
    %v188 = vld [vmem:[#allocation4 + $0x154] sm:$0xf]
    %v189 = vld [vmem:[#allocation4 + $0x158] sm:$0xf]
    %v190 = vld [vmem:[#allocation4 + $0x15c] sm:$0xf]
    %v191 = vld [vmem:[#allocation4 + $0x160] sm:$0xf]
    %v192 = vld [vmem:[#allocation4 + $0x164] sm:$0xf]
    %v193 = vld [vmem:[#allocation4 + $0x168] sm:$0xf]
    %v194 = vld [vmem:[#allocation4 + $0x16c] sm:$0xf]
    %v195 = vld [vmem:[#allocation4 + $0x170] sm:$0xf]
    %v196 = vld [vmem:[#allocation4 + $0x174] sm:$0xf]
    %v197 = vld [vmem:[#allocation4 + $0x178] sm:$0xf]
    %v198 = vld [vmem:[#allocation4 + $0x17c] sm:$0xf]
    %v199 = vld [vmem:[#allocation4 + $0x180] sm:$0xf]
    %v200 = vld [vmem:[#allocation4 + $0x184] sm:$0xf]
    %v201 = vld [vmem:[%s2] sm:$0x1]
    %v203 = vlaneseq
    %v204 = vshrl.u32 %v203, 7
    %v205 = vsub.s32 0, %v204
    %v206 = vrot.slane %v201, %v205
    %v306 = vunpack.c.l.b16 %v103
    %v307 = vunpack.c.l.b16 %v104
    %v308 = vunpack.c.l.b16 %v105
    %v309 = vunpack.c.l.b16 %v106
    %v310 = vunpack.c.l.b16 %v107
    %v311 = vunpack.c.l.b16 %v108
    %v312 = vunpack.c.l.b16 %v109
    %v313 = vunpack.c.l.b16 %v110
    %v314 = vunpack.c.l.b16 %v111
    %v315 = vunpack.c.l.b16 %v112
    %v316 = vunpack.c.l.b16 %v113
    %v317 = vunpack.c.l.b16 %v114
    %v318 = vunpack.c.l.b16 %v115
    %v319 = vunpack.c.l.b16 %v116
    %v320 = vunpack.c.l.b16 %v117
    %v321 = vunpack.c.l.b16 %v118
    %v322 = vunpack.c.l.b16 %v119
    %v323 = vunpack.c.l.b16 %v120
    %v324 = vunpack.c.l.b16 %v121
    %v325 = vunpack.c.l.b16 %v122
    %v326 = vunpack.c.l.b16 %v123
    %v327 = vunpack.c.l.b16 %v124
    %v328 = vunpack.c.l.b16 %v125
    %v329 = vunpack.c.l.b16 %v126
    %v330 = vunpack.c.l.b16 %v127
    %v331 = vunpack.c.l.b16 %v128
    %v332 = vunpack.c.l.b16 %v129
    %v333 = vunpack.c.l.b16 %v130
    %v334 = vunpack.c.l.b16 %v131
    %v335 = vunpack.c.l.b16 %v132
    %v336 = vunpack.c.l.b16 %v133
    %v337 = vunpack.c.l.b16 %v134
    %v338 = vunpack.c.l.b16 %v135
    %v339 = vunpack.c.l.b16 %v136
    %v340 = vunpack.c.l.b16 %v137
    %v341 = vunpack.c.l.b16 %v138
    %v342 = vunpack.c.l.b16 %v139
    %v343 = vunpack.c.l.b16 %v140
    %v344 = vunpack.c.l.b16 %v141
    %v345 = vunpack.c.l.b16 %v142
    %v346 = vunpack.c.l.b16 %v143
    %v347 = vunpack.c.l.b16 %v144
    %v348 = vunpack.c.l.b16 %v145
    %v349 = vunpack.c.l.b16 %v146
    %v350 = vunpack.c.l.b16 %v147
    %v351 = vunpack.c.l.b16 %v148
    %v352 = vunpack.c.l.b16 %v149
    %v353 = vunpack.c.l.b16 %v150
    %v354 = vunpack.c.l.b16 %v151
    %v355 = vunpack.c.l.b16 %v152
    %v356 = vunpack.c.l.b16 %v153
    %v357 = vunpack.c.l.b16 %v154
    %v358 = vunpack.c.l.b16 %v155
    %v359 = vunpack.c.l.b16 %v156
    %v360 = vunpack.c.l.b16 %v157
    %v361 = vunpack.c.l.b16 %v158
    %v362 = vunpack.c.l.b16 %v159
    %v363 = vunpack.c.l.b16 %v160
    %v364 = vunpack.c.l.b16 %v161
    %v365 = vunpack.c.l.b16 %v162
    %v366 = vunpack.c.l.b16 %v163
    %v367 = vunpack.c.l.b16 %v164
    %v368 = vunpack.c.l.b16 %v165
    %v369 = vunpack.c.l.b16 %v166
    %v370 = vunpack.c.l.b16 %v167
    %v371 = vunpack.c.l.b16 %v168
    %v372 = vunpack.c.l.b16 %v169
    %v373 = vunpack.c.l.b16 %v170
    %v374 = vunpack.c.l.b16 %v171
    %v375 = vunpack.c.l.b16 %v172
    %v376 = vunpack.c.l.b16 %v173
    %v377 = vunpack.c.l.b16 %v174
    %v378 = vunpack.c.l.b16 %v175
    %v379 = vunpack.c.l.b16 %v176
    %v380 = vunpack.c.l.b16 %v177
    %v381 = vunpack.c.l.b16 %v178
    %v382 = vunpack.c.l.b16 %v179
    %v383 = vunpack.c.l.b16 %v180
    %v384 = vunpack.c.l.b16 %v181
    %v385 = vunpack.c.l.b16 %v182
    %v386 = vunpack.c.l.b16 %v183
    %v387 = vunpack.c.l.b16 %v184
    %v388 = vunpack.c.l.b16 %v185
    %v389 = vunpack.c.l.b16 %v186
    %v390 = vunpack.c.l.b16 %v187
    %v391 = vunpack.c.l.b16 %v188
    %v392 = vunpack.c.l.b16 %v189
    %v393 = vunpack.c.l.b16 %v190
    %v394 = vunpack.c.l.b16 %v191
    %v395 = vunpack.c.l.b16 %v192
    %v396 = vunpack.c.l.b16 %v193
    %v397 = vunpack.c.l.b16 %v194
    %v398 = vunpack.c.l.b16 %v195
    %v399 = vunpack.c.l.b16 %v196
    %v400 = vunpack.c.l.b16 %v197
    %v401 = vunpack.c.l.b16 %v198
    %v402 = vunpack.c.l.b16 %v199
    %v403 = vunpack.c.l.b16 %v200
    %v404 = vpack.c.b16 %v307, %v306
    %v405 = vpack.c.b16 %v309, %v308
    %v406 = vpack.c.b16 %v311, %v310
    %v407 = vpack.c.b16 %v313, %v312
    %v408 = vpack.c.b16 %v315, %v314
    %v409 = vpack.c.b16 %v317, %v316
    %v410 = vpack.c.b16 %v319, %v318
    %v411 = vpack.c.b16 %v321, %v320
    %v412 = vpack.c.b16 %v323, %v322
    %v413 = vpack.c.b16 %v325, %v324
    %v414 = vpack.c.b16 %v327, %v326
    %v415 = vpack.c.b16 %v329, %v328
    %v416 = vpack.c.b16 %v331, %v330
    %v417 = vpack.c.b16 %v333, %v332
    %v418 = vpack.c.b16 %v335, %v334
    %v419 = vpack.c.b16 %v337, %v336
    %v420 = vpack.c.b16 %v339, %v338
    %v421 = vpack.c.b16 %v341, %v340
    %v422 = vpack.c.b16 %v343, %v342
    %v423 = vpack.c.b16 %v345, %v344
    %v424 = vpack.c.b16 %v347, %v346
    %v425 = vpack.c.b16 %v349, %v348
    %v426 = vpack.c.b16 %v351, %v350
    %v427 = vpack.c.b16 %v353, %v352
    %v428 = vpack.c.b16 %v355, %v354
    %v429 = vpack.c.b16 %v357, %v356
    %v430 = vpack.c.b16 %v359, %v358
    %v431 = vpack.c.b16 %v361, %v360
    %v432 = vpack.c.b16 %v363, %v362
    %v433 = vpack.c.b16 %v365, %v364
    %v434 = vpack.c.b16 %v367, %v366
    %v435 = vpack.c.b16 %v369, %v368
    %v436 = vpack.c.b16 %v371, %v370
    %v437 = vpack.c.b16 %v373, %v372
    %v438 = vpack.c.b16 %v375, %v374
    %v439 = vpack.c.b16 %v377, %v376
    %v440 = vpack.c.b16 %v379, %v378
    %v441 = vpack.c.b16 %v381, %v380
    %v442 = vpack.c.b16 %v383, %v382
    %v443 = vpack.c.b16 %v385, %v384
    %v444 = vpack.c.b16 %v387, %v386
    %v445 = vpack.c.b16 %v389, %v388
    %v446 = vpack.c.b16 %v391, %v390
    %v447 = vpack.c.b16 %v393, %v392
    %v448 = vpack.c.b16 %v395, %v394
    %v449 = vpack.c.b16 %v397, %v396
    %v450 = vpack.c.b16 %v399, %v398
    %v451 = vpack.c.b16 %v401, %v400
    %v452 = vpack.c.b16 %v403, %v402
    %vm502 = vcmask 130048
    %v504 = vsel %vm502, %v102, 0
    %506 = vmatprep.subr.bf16.mxu0 0
    %507 = vmatpush1.bf16.msra.mxu0 %v404
    %508 = vmatprep.subr.bf16.mxu0 0
    %509 = vmatpush1.bf16.msra.mxu0 %v405
    %510 = vmatprep.subr.bf16.mxu0 0
    %511 = vmatpush1.bf16.msra.mxu0 %v406
    %512 = vmatprep.subr.bf16.mxu0 0
    %513 = vmatpush1.bf16.msra.mxu0 %v407
    %514 = vmatprep.subr.bf16.mxu0 0
    %515 = vmatpush1.bf16.msra.mxu0 %v408
    %516 = vmatprep.subr.bf16.mxu0 0
    %517 = vmatpush1.bf16.msra.mxu0 %v409
    %518 = vmatprep.subr.bf16.mxu0 0
    %519 = vmatpush1.bf16.msra.mxu0 %v410
    %520 = vmatprep.subr.bf16.mxu0 0
    %521 = vmatpush1.bf16.msra.mxu0 %v411
    %522 = vmatprep.subr.bf16.mxu0 0
    %523 = vmatpush1.bf16.msra.mxu0 %v412
    %524 = vmatprep.subr.bf16.mxu0 0
    %525 = vmatpush1.bf16.msra.mxu0 %v413
    %526 = vmatprep.subr.bf16.mxu0 0
    %527 = vmatpush1.bf16.msra.mxu0 %v414
    %528 = vmatprep.subr.bf16.mxu0 0
    %529 = vmatpush1.bf16.msra.mxu0 %v415
    %530 = vmatprep.subr.bf16.mxu0 0
    %531 = vmatpush1.bf16.msra.mxu0 %v416
    %532 = vmatprep.subr.bf16.mxu0 0
    %533 = vmatpush1.bf16.msra.mxu0 %v417
    %534 = vmatprep.subr.bf16.mxu0 0
    %535 = vmatpush1.bf16.msra.mxu0 %v418
    %536 = vmatprep.subr.bf16.mxu0 0
    %537 = vmatpush1.bf16.msra.mxu0 %v419
    %538 = vmatprep.mubr.bf16.mxu0 %v97
    %539 = vmatmul.mubr.bf16.gmra.mrb[0].mxu0 %v96
    %v540 = vpop.f32.mrb[0].mxu0
    %v541 = vadd.f32 %v206, %v540
    %v542 = vpop.f32.mrb[0].mxu0
    %v543 = vpop.f32.mrb[0].mxu0
    %v544 = vadd.f32 %v206, %v543
    %v545 = vpop.f32.mrb[0].mxu0
    %546 = vdwg.mxu0
    %547 = vmatprep.subr.bf16.mxu0 0
    %548 = vmatpush1.bf16.msra.mxu0 %v420
    %549 = vmatprep.subr.bf16.mxu0 0
    %550 = vmatpush1.bf16.msra.mxu0 %v421
    %551 = vmatprep.subr.bf16.mxu0 0
    %552 = vmatpush1.bf16.msra.mxu0 %v422
    %553 = vmatprep.subr.bf16.mxu0 0
    %554 = vmatpush1.bf16.msra.mxu0 %v423
    %555 = vmatprep.subr.bf16.mxu0 0
    %556 = vmatpush1.bf16.msra.mxu0 %v424
    %557 = vmatprep.subr.bf16.mxu0 0
    %558 = vmatpush1.bf16.msra.mxu0 %v425
    %559 = vmatprep.subr.bf16.mxu0 0
    %560 = vmatpush1.bf16.msra.mxu0 %v426
    %561 = vmatprep.subr.bf16.mxu0 0
    %562 = vmatpush1.bf16.msra.mxu0 %v427
    %563 = vmatprep.subr.bf16.mxu0 0
    %564 = vmatpush1.bf16.msra.mxu0 %v428
    %565 = vmatprep.subr.bf16.mxu0 0
    %566 = vmatpush1.bf16.msra.mxu0 %v429
    %567 = vmatprep.subr.bf16.mxu0 0
    %568 = vmatpush1.bf16.msra.mxu0 %v430
    %569 = vmatprep.subr.bf16.mxu0 0
    %570 = vmatpush1.bf16.msra.mxu0 %v431
    %571 = vmatprep.subr.bf16.mxu0 0
    %572 = vmatpush1.bf16.msra.mxu0 %v432
    %573 = vmatprep.subr.bf16.mxu0 0
    %574 = vmatpush1.bf16.msra.mxu0 %v433
    %575 = vmatprep.subr.bf16.mxu0 0
    %576 = vmatpush1.bf16.msra.mxu0 %v434
    %577 = vmatprep.subr.bf16.mxu0 0
    %578 = vmatpush1.bf16.msra.mxu0 %v435
    %579 = vmatprep.mubr.bf16.mxu0 %v99
    %580 = vmatmul.mubr.bf16.gmra.mrb[0].mxu0 %v98
    %v581 = vpop.f32.mrb[0].mxu0
    %v582 = vadd.f32 %v541, %v581
    %v583 = vpop.f32.mrb[0].mxu0
    %v584 = vpop.f32.mrb[0].mxu0
    %v585 = vadd.f32 %v544, %v584
    %v586 = vpop.f32.mrb[0].mxu0
    %587 = vdwg.mxu0
    %588 = vmatprep.subr.bf16.mxu0 0
    %589 = vmatpush1.bf16.msra.mxu0 %v436
    %590 = vmatprep.subr.bf16.mxu0 0
    %591 = vmatpush1.bf16.msra.mxu0 %v437
    %592 = vmatprep.subr.bf16.mxu0 0
    %593 = vmatpush1.bf16.msra.mxu0 %v438
    %594 = vmatprep.subr.bf16.mxu0 0
    %595 = vmatpush1.bf16.msra.mxu0 %v439
    %596 = vmatprep.subr.bf16.mxu0 0
    %597 = vmatpush1.bf16.msra.mxu0 %v440
    %598 = vmatprep.subr.bf16.mxu0 0
    %599 = vmatpush1.bf16.msra.mxu0 %v441
    %600 = vmatprep.subr.bf16.mxu0 0
    %601 = vmatpush1.bf16.msra.mxu0 %v442
    %602 = vmatprep.subr.bf16.mxu0 0
    %603 = vmatpush1.bf16.msra.mxu0 %v443
    %604 = vmatprep.subr.bf16.mxu0 0
    %605 = vmatpush1.bf16.msra.mxu0 %v444
    %606 = vmatprep.subr.bf16.mxu0 0
    %607 = vmatpush1.bf16.msra.mxu0 %v445
    %608 = vmatprep.subr.bf16.mxu0 0
    %609 = vmatpush1.bf16.msra.mxu0 %v446
    %610 = vmatprep.subr.bf16.mxu0 0
    %611 = vmatpush1.bf16.msra.mxu0 %v447
    %612 = vmatprep.subr.bf16.mxu0 0
    %613 = vmatpush1.bf16.msra.mxu0 %v448
    %614 = vmatprep.subr.bf16.mxu0 0
    %615 = vmatpush1.bf16.msra.mxu0 %v449
    %616 = vmatprep.subr.bf16.mxu0 0
    %617 = vmatpush1.bf16.msra.mxu0 %v450
    %618 = vmatprep.subr.bf16.mxu0 0
    %619 = vmatpush1.bf16.msra.mxu0 %v451
    %620 = vmatprep.mubr.bf16.mxu0 %v101
    %621 = vmatmul.mubr.bf16.gmra.mrb[0].mxu0 %v100
    %v622 = vpop.f32.mrb[0].mxu0
    %v623 = vadd.f32 %v582, %v622
    %v624 = vpop.f32.mrb[0].mxu0
    %v625 = vpop.f32.mrb[0].mxu0
    %v626 = vadd.f32 %v585, %v625
    %v627 = vpop.f32.mrb[0].mxu0
    %628 = vdwg.mxu0
    %629 = vmatprep.subr.bf16.mxu0 0
    %630 = vmatpush1.bf16.msra.mxu0 %v452
    %631 = vmatprep.subr.bf16.mxu0 0
    %632 = vmatpush1.bf16.msra.mxu0 0
    %633 = vmatprep.subr.bf16.mxu0 0
    %634 = vmatpush1.bf16.msra.mxu0 0
    %635 = vmatprep.subr.bf16.mxu0 0
    %636 = vmatpush1.bf16.msra.mxu0 0
    %637 = vmatprep.subr.bf16.mxu0 0
    %638 = vmatpush1.bf16.msra.mxu0 0
    %639 = vmatprep.subr.bf16.mxu0 0
    %640 = vmatpush1.bf16.msra.mxu0 0
    %641 = vmatprep.subr.bf16.mxu0 0
    %642 = vmatpush1.bf16.msra.mxu0 0
    %643 = vmatprep.subr.bf16.mxu0 0
    %644 = vmatpush1.bf16.msra.mxu0 0
    %645 = vmatprep.subr.bf16.mxu0 0
    %646 = vmatpush1.bf16.msra.mxu0 0
    %647 = vmatprep.subr.bf16.mxu0 0
    %648 = vmatpush1.bf16.msra.mxu0 0
    %649 = vmatprep.subr.bf16.mxu0 0
    %650 = vmatpush1.bf16.msra.mxu0 0
    %651 = vmatprep.subr.bf16.mxu0 0
    %652 = vmatpush1.bf16.msra.mxu0 0
    %653 = vmatprep.subr.bf16.mxu0 0
    %654 = vmatpush1.bf16.msra.mxu0 0
    %655 = vmatprep.subr.bf16.mxu0 0
    %656 = vmatpush1.bf16.msra.mxu0 0
    %657 = vmatprep.subr.bf16.mxu0 0
    %658 = vmatpush1.bf16.msra.mxu0 0
    %659 = vmatprep.subr.bf16.mxu0 0
    %660 = vmatpush1.bf16.msra.mxu0 0
    %661 = vmatprep.mubr.bf16.mxu0 0
    %662 = vmatmul.mubr.bf16.gmra.mrb[0].mxu0 %v504
    %v663 = vpop.f32.mrb[0].mxu0
    %v664 = vadd.f32 %v623, %v663
    %v665 = vpop.f32.mrb[0].mxu0
    %v666 = vpop.f32.mrb[0].mxu0
    %v667 = vadd.f32 %v626, %v666
    %v668 = vpop.f32.mrb[0].mxu0
    %669 = vdwg.mxu0
    %v670 = vmax.f32 %v664, 0.0
    %v671 = vmax.f32 %v667, 0.0
    %v672 = vpack.c.bf16 %v671, %v670
    %v673 = vld [vmem:[#allocation6] sm:$0xff]
    %v674 = vld [vmem:[#allocation6 + $0x8] sm:$0xff]
    %v675 = vld [vmem:[#allocation6 + $0x10] sm:$0xff]
    %v676 = vld [vmem:[#allocation6 + $0x18] sm:$0xff]
    %v677 = vld [vmem:[#allocation6 + $0x20] sm:$0xff]
    %v678 = vld [vmem:[#allocation6 + $0x28] sm:$0xff]
    %v679 = vld [vmem:[#allocation6 + $0x30] sm:$0xff]
    %v680 = vld [vmem:[#allocation6 + $0x38] sm:$0xff]
    %v681 = vld [vmem:[#allocation6 + $0x40] sm:$0xff]
    %v682 = vld [vmem:[#allocation6 + $0x48] sm:$0xff]
    %v683 = vld [vmem:[#allocation6 + $0x50] sm:$0xff]
    %v684 = vld [vmem:[#allocation6 + $0x58] sm:$0xff]
    %v685 = vld [vmem:[#allocation6 + $0x60] sm:$0xff]
    %v686 = vld [vmem:[#allocation6 + $0x68] sm:$0xff]
    %v687 = vld [vmem:[#allocation6 + $0x70] sm:$0xff]
    %v688 = vld [vmem:[#allocation6 + $0x78] sm:$0xff]
    %v689 = vld [vmem:[%s4] sm:$0x3]
    %v691 = vlaneseq
    %v692 = vshrl.u32 %v691, 7
    %v693 = vsub.s32 0, %v692
    %v694 = vrot.slane %v689, %v693
    %v695 = vlaneseq
    %v696 = vshrl.u32 %v695, 7
    %v697 = vsub.s32 1, %v696
    %v698 = vrot.slane %v689, %v697
    %v717 = vunpack.c.l.b16 %v673
    %v718 = vunpack.c.h.b16 %v673
    %v719 = vunpack.c.l.b16 %v674
    %v720 = vunpack.c.h.b16 %v674
    %v721 = vunpack.c.l.b16 %v675
    %v722 = vunpack.c.h.b16 %v675
    %v723 = vunpack.c.l.b16 %v676
    %v724 = vunpack.c.h.b16 %v676
    %v725 = vunpack.c.l.b16 %v677
    %v726 = vunpack.c.h.b16 %v677
    %v727 = vunpack.c.l.b16 %v678
    %v728 = vunpack.c.h.b16 %v678
    %v729 = vunpack.c.l.b16 %v679
    %v730 = vunpack.c.h.b16 %v679
    %v731 = vunpack.c.l.b16 %v680
    %v732 = vunpack.c.h.b16 %v680
    %v733 = vunpack.c.l.b16 %v681
    %v734 = vunpack.c.h.b16 %v681
    %v735 = vunpack.c.l.b16 %v682
    %v736 = vunpack.c.h.b16 %v682
    %v737 = vunpack.c.l.b16 %v683
    %v738 = vunpack.c.h.b16 %v683
    %v739 = vunpack.c.l.b16 %v684
    %v740 = vunpack.c.h.b16 %v684
    %v741 = vunpack.c.l.b16 %v685
    %v742 = vunpack.c.h.b16 %v685
    %v743 = vunpack.c.l.b16 %v686
    %v744 = vunpack.c.h.b16 %v686
    %v745 = vunpack.c.l.b16 %v687
    %v746 = vunpack.c.h.b16 %v687
    %v747 = vunpack.c.l.b16 %v688
    %v748 = vunpack.c.h.b16 %v688
    %v749 = vpack.c.b16 %v719, %v717
    %v750 = vpack.c.b16 %v720, %v718
    %v751 = vpack.c.b16 %v723, %v721
    %v752 = vpack.c.b16 %v724, %v722
    %v753 = vpack.c.b16 %v727, %v725
    %v754 = vpack.c.b16 %v728, %v726
    %v755 = vpack.c.b16 %v731, %v729
    %v756 = vpack.c.b16 %v732, %v730
    %v757 = vpack.c.b16 %v735, %v733
    %v758 = vpack.c.b16 %v736, %v734
    %v759 = vpack.c.b16 %v739, %v737
    %v760 = vpack.c.b16 %v740, %v738
    %v761 = vpack.c.b16 %v743, %v741
    %v762 = vpack.c.b16 %v744, %v742
    %v763 = vpack.c.b16 %v747, %v745
    %v764 = vpack.c.b16 %v748, %v746
    %781 = vmatprep.subr.bf16.mxu0 %v750
    %782 = vmatpush1.bf16.msra.mxu0 %v749
    %783 = vmatprep.subr.bf16.mxu0 %v752
    %784 = vmatpush1.bf16.msra.mxu0 %v751
    %785 = vmatprep.subr.bf16.mxu0 %v754
    %786 = vmatpush1.bf16.msra.mxu0 %v753
    %787 = vmatprep.subr.bf16.mxu0 %v756
    %788 = vmatpush1.bf16.msra.mxu0 %v755
    %789 = vmatprep.subr.bf16.mxu0 %v758
    %790 = vmatpush1.bf16.msra.mxu0 %v757
    %791 = vmatprep.subr.bf16.mxu0 %v760
    %792 = vmatpush1.bf16.msra.mxu0 %v759
    %793 = vmatprep.subr.bf16.mxu0 %v762
    %794 = vmatpush1.bf16.msra.mxu0 %v761
    %795 = vmatprep.subr.bf16.mxu0 %v764
    %796 = vmatpush1.bf16.msra.mxu0 %v763
    %797 = vmatprep.subr.bf16.mxu0 0
    %798 = vmatpush1.bf16.msra.mxu0 0
    %799 = vmatprep.subr.bf16.mxu0 0
    %800 = vmatpush1.bf16.msra.mxu0 0
    %801 = vmatprep.subr.bf16.mxu0 0
    %802 = vmatpush1.bf16.msra.mxu0 0
    %803 = vmatprep.subr.bf16.mxu0 0
    %804 = vmatpush1.bf16.msra.mxu0 0
    %805 = vmatprep.subr.bf16.mxu0 0
    %806 = vmatpush1.bf16.msra.mxu0 0
    %807 = vmatprep.subr.bf16.mxu0 0
    %808 = vmatpush1.bf16.msra.mxu0 0
    %809 = vmatprep.subr.bf16.mxu0 0
    %810 = vmatpush1.bf16.msra.mxu0 0
    %811 = vmatprep.subr.bf16.mxu0 0
    %812 = vmatpush1.bf16.msra.mxu0 0
    %813 = vmatprep.mubr.bf16.mxu0 0
    %814 = vmatmul.mubr.bf16.gmra.mrb[0].mxu0 %v672
    %v815 = vpop.f32.mrb[0].mxu0
    %v816 = vadd.f32 %v694, %v815
    %v817 = vpop.f32.mrb[0].mxu0
    %v818 = vadd.f32 %v698, %v817
    %v819 = vpop.f32.mrb[0].mxu0
    %v820 = vadd.f32 %v694, %v819
    %v821 = vpop.f32.mrb[0].mxu0
    %v822 = vadd.f32 %v698, %v821
    %823 = vdwg.mxu0
    %v824 = vmax.f32 %v816, 0.0
    %v825 = vmax.f32 %v818, 0.0
    %v826 = vmax.f32 %v820, 0.0
    %v827 = vmax.f32 %v822, 0.0
    %v828 = vpack.c.bf16 %v826, %v824
    %v829 = vpack.c.bf16 %v827, %v825
    %v830 = vld [vmem:[#allocation7] sm:$0xf]
    %v831 = vld [vmem:[#allocation7 + $0x4] sm:$0xf]
    %v832 = vld [vmem:[#allocation7 + $0x8] sm:$0xf]
    %v833 = vld [vmem:[#allocation7 + $0xc] sm:$0xf]
    %v834 = vld [vmem:[#allocation7 + $0x10] sm:$0xf]
    %v835 = vld [vmem:[#allocation7 + $0x14] sm:$0xf]
    %v836 = vld [vmem:[#allocation7 + $0x18] sm:$0xf]
    %v837 = vld [vmem:[#allocation7 + $0x1c] sm:$0xf]
    %v838 = vld [vmem:[#allocation7 + $0x20] sm:$0xf]
    %v839 = vld [vmem:[#allocation7 + $0x24] sm:$0xf]
    %v840 = vld [vmem:[#allocation7 + $0x28] sm:$0xf]
    %v841 = vld [vmem:[#allocation7 + $0x2c] sm:$0xf]
    %v842 = vld [vmem:[#allocation7 + $0x30] sm:$0xf]
    %v843 = vld [vmem:[#allocation7 + $0x34] sm:$0xf]
    %v844 = vld [vmem:[#allocation7 + $0x38] sm:$0xf]
    %v845 = vld [vmem:[#allocation7 + $0x3c] sm:$0xf]
    %v846 = vld [vmem:[#allocation7 + $0x40] sm:$0xf]
    %v847 = vld [vmem:[#allocation7 + $0x44] sm:$0xf]
    %v848 = vld [vmem:[#allocation7 + $0x48] sm:$0xf]
    %v849 = vld [vmem:[#allocation7 + $0x4c] sm:$0xf]
    %v850 = vld [vmem:[#allocation7 + $0x50] sm:$0xf]
    %v851 = vld [vmem:[#allocation7 + $0x54] sm:$0xf]
    %v852 = vld [vmem:[#allocation7 + $0x58] sm:$0xf]
    %v853 = vld [vmem:[#allocation7 + $0x5c] sm:$0xf]
    %v854 = vld [vmem:[#allocation7 + $0x60] sm:$0xf]
    %v855 = vld [vmem:[#allocation7 + $0x64] sm:$0xf]
    %v856 = vld [vmem:[#allocation7 + $0x68] sm:$0xf]
    %v857 = vld [vmem:[#allocation7 + $0x6c] sm:$0xf]
    %v858 = vld [vmem:[#allocation7 + $0x70] sm:$0xf]
    %v859 = vld [vmem:[#allocation7 + $0x74] sm:$0xf]
    %v860 = vld [vmem:[#allocation7 + $0x78] sm:$0xf]
    %v861 = vld [vmem:[#allocation7 + $0x7c] sm:$0xf]
    %v862 = vld [vmem:[%s6] sm:$0x1]
    %v864 = vlaneseq
    %v865 = vshrl.u32 %v864, 7
    %v866 = vsub.s32 0, %v865
    %v867 = vrot.slane %v862, %v866
    %v901 = vunpack.c.l.b16 %v830
    %v902 = vunpack.c.l.b16 %v831
    %v903 = vunpack.c.l.b16 %v832
    %v904 = vunpack.c.l.b16 %v833
    %v905 = vunpack.c.l.b16 %v834
    %v906 = vunpack.c.l.b16 %v835
    %v907 = vunpack.c.l.b16 %v836
    %v908 = vunpack.c.l.b16 %v837
    %v909 = vunpack.c.l.b16 %v838
    %v910 = vunpack.c.l.b16 %v839
    %v911 = vunpack.c.l.b16 %v840
    %v912 = vunpack.c.l.b16 %v841
    %v913 = vunpack.c.l.b16 %v842
    %v914 = vunpack.c.l.b16 %v843
    %v915 = vunpack.c.l.b16 %v844
    %v916 = vunpack.c.l.b16 %v845
    %v917 = vunpack.c.l.b16 %v846
    %v918 = vunpack.c.l.b16 %v847
    %v919 = vunpack.c.l.b16 %v848
    %v920 = vunpack.c.l.b16 %v849
    %v921 = vunpack.c.l.b16 %v850
    %v922 = vunpack.c.l.b16 %v851
    %v923 = vunpack.c.l.b16 %v852
    %v924 = vunpack.c.l.b16 %v853
    %v925 = vunpack.c.l.b16 %v854
    %v926 = vunpack.c.l.b16 %v855
    %v927 = vunpack.c.l.b16 %v856
    %v928 = vunpack.c.l.b16 %v857
    %v929 = vunpack.c.l.b16 %v858
    %v930 = vunpack.c.l.b16 %v859
    %v931 = vunpack.c.l.b16 %v860
    %v932 = vunpack.c.l.b16 %v861
    %v933 = vpack.c.b16 %v902, %v901
    %v934 = vpack.c.b16 %v904, %v903
    %v935 = vpack.c.b16 %v906, %v905
    %v936 = vpack.c.b16 %v908, %v907
    %v937 = vpack.c.b16 %v910, %v909
    %v938 = vpack.c.b16 %v912, %v911
    %v939 = vpack.c.b16 %v914, %v913
    %v940 = vpack.c.b16 %v916, %v915
    %v941 = vpack.c.b16 %v918, %v917
    %v942 = vpack.c.b16 %v920, %v919
    %v943 = vpack.c.b16 %v922, %v921
    %v944 = vpack.c.b16 %v924, %v923
    %v945 = vpack.c.b16 %v926, %v925
    %v946 = vpack.c.b16 %v928, %v927
    %v947 = vpack.c.b16 %v930, %v929
    %v948 = vpack.c.b16 %v932, %v931
    %965 = vmatprep.subr.bf16.mxu0 0
    %966 = vmatpush1.bf16.msra.mxu0 %v933
    %967 = vmatprep.subr.bf16.mxu0 0
    %968 = vmatpush1.bf16.msra.mxu0 %v934
    %969 = vmatprep.subr.bf16.mxu0 0
    %970 = vmatpush1.bf16.msra.mxu0 %v935
    %971 = vmatprep.subr.bf16.mxu0 0
    %972 = vmatpush1.bf16.msra.mxu0 %v936
    %973 = vmatprep.subr.bf16.mxu0 0
    %974 = vmatpush1.bf16.msra.mxu0 %v937
    %975 = vmatprep.subr.bf16.mxu0 0
    %976 = vmatpush1.bf16.msra.mxu0 %v938
    %977 = vmatprep.subr.bf16.mxu0 0
    %978 = vmatpush1.bf16.msra.mxu0 %v939
    %979 = vmatprep.subr.bf16.mxu0 0
    %980 = vmatpush1.bf16.msra.mxu0 %v940
    %981 = vmatprep.subr.bf16.mxu0 0
    %982 = vmatpush1.bf16.msra.mxu0 %v941
    %983 = vmatprep.subr.bf16.mxu0 0
    %984 = vmatpush1.bf16.msra.mxu0 %v942
    %985 = vmatprep.subr.bf16.mxu0 0
    %986 = vmatpush1.bf16.msra.mxu0 %v943
    %987 = vmatprep.subr.bf16.mxu0 0
    %988 = vmatpush1.bf16.msra.mxu0 %v944
    %989 = vmatprep.subr.bf16.mxu0 0
    %990 = vmatpush1.bf16.msra.mxu0 %v945
    %991 = vmatprep.subr.bf16.mxu0 0
    %992 = vmatpush1.bf16.msra.mxu0 %v946
    %993 = vmatprep.subr.bf16.mxu0 0
    %994 = vmatpush1.bf16.msra.mxu0 %v947
    %995 = vmatprep.subr.bf16.mxu0 0
    %996 = vmatpush1.bf16.msra.mxu0 %v948
    %997 = vmatprep.mubr.bf16.mxu0 %v829
    %998 = vmatmul.mubr.bf16.gmra.mrb[0].mxu0 %v828
    %v999 = vpop.f32.mrb[0].mxu0
    %v1000 = vadd.f32 %v867, %v999
    %v1001 = vpop.f32.mrb[0].mxu0
    %v1002 = vpop.f32.mrb[0].mxu0
    %v1003 = vadd.f32 %v867, %v1002
    %v1004 = vpop.f32.mrb[0].mxu0
    %1005 = vdwg.mxu0
    %v1006 = vpack.c.bf16 %v1003, %v1000
    %v1008 = vunpack.c.l.b16 %v1006
    %v1009 = vunpack.c.h.b16 %v1006
    %v1010 = vpack.c.b16 %v1008, %v1008
    %v1011 = vpack.c.b16 %v1009, %v1009
    %1014 = vst [vmem:[#allocation9] sm:$0xf] %v1010
    %1015 = vst [vmem:[#allocation9 + $0x4] sm:$0xf] %v1011
    // Predicated region
    $region46: #{mnist_nn_forward.1} parent=1 // pred_check
      _
    $region47: #{mnist_nn_forward.1} parent=1 // pred_check_branch
      %1017 = sbr.rel (0) target = $region49
    $region48: #{mnist_nn_forward.1} parent=1 // pred_region
      // Predicated region
      $region50: #{mnist_nn_forward.1} parent=48 // pred_check
        _
      $region51: #{mnist_nn_forward.1} parent=48 // pred_check_branch
        %1019 = sbr.rel (0) target = $region53
      $region52: #{mnist_nn_forward.1} parent=48 // pred_region
        // Predicated region
        $region54: #{mnist_nn_forward.1} parent=52 // pred_check
          _
        $region55: #{mnist_nn_forward.1} parent=52 // pred_check_branch
          %1021 = sbr.rel target = $region57
        $region56: #{mnist_nn_forward.1} parent=52 // pred_region
          // Predicated region
          $region69: #{mnist_nn_forward.1} parent=56 // pred_check
            _
          $region70: #{mnist_nn_forward.1} parent=56 // pred_check_branch
            %1036 = sbr.rel (0) target = $region72
          $region71: #{mnist_nn_forward.1} parent=56 // pred_region
            loop: start=0, step=1, limit=1
            $region73: #{mnist_nn_forward.1} parent=71 // loop_pre_header
              _
            $region74: #{mnist_nn_forward.1} parent=71 // loop_header
              %s1039 = sphi 0, %s1043
              %p1040 = scmp.ge.s32.totalorder %s1039, 1
              %s1044 = sphi [#allocation9], [#allocation9]
              %s1045 = sphi %s7, %s7
            $region75: #{mnist_nn_forward.1} parent=71 // loop_header_branch
              %1042 = sbr.rel (%p1040) target = $region79
            $region76: #{mnist_nn_forward.1} parent=71 // loop_body
              %v1046 = vld [vmem:[%s1044] sm:$0xf]
              %1047 = vst [vmem:[%s1045] sm:$0xf] %v1046
            $region77: #{mnist_nn_forward.1} parent=71 // loop_footer
              %s1043 = sadd.s32 1, %s1039
            $region78: #{mnist_nn_forward.1} parent=71 // loop_footer_branch
              %1038 = sbr.rel target = $region74
            $region79: #{mnist_nn_forward.1} parent=71 // loop_exit
              _
          $region72: #{mnist_nn_forward.1} parent=56 // pred_fallthru
            _
        $region57: #{mnist_nn_forward.1} parent=52 // pred_fallthru
          _
        // Predicated region
        $region58: #{mnist_nn_forward.1} parent=52 // pred_check
          _
        $region59: #{mnist_nn_forward.1} parent=52 // pred_check_branch
          %1023 = sbr.rel (0) target = $region61
        $region60: #{mnist_nn_forward.1} parent=52 // pred_region
          loop: start=0, step=1, limit=1
          $region62: #{mnist_nn_forward.1} parent=60 // loop_pre_header
            _
          $region63: #{mnist_nn_forward.1} parent=60 // loop_header
            %s1026 = sphi 0, %s1030
            %p1027 = scmp.ge.s32.totalorder %s1026, 1
            %s1031 = sphi [#allocation9], [#allocation9]
            %s1032 = sphi %s7, %s7
          $region64: #{mnist_nn_forward.1} parent=60 // loop_header_branch
            %1029 = sbr.rel (%p1027) target = $region68
          $region65: #{mnist_nn_forward.1} parent=60 // loop_body
            %v1033 = vld [vmem:[%s1031] sm:$0xf]
            %1034 = vst [vmem:[%s1032] sm:$0xf] %v1033
          $region66: #{mnist_nn_forward.1} parent=60 // loop_footer
            %s1030 = sadd.s32 1, %s1026
          $region67: #{mnist_nn_forward.1} parent=60 // loop_footer_branch
            %1025 = sbr.rel target = $region63
          $region68: #{mnist_nn_forward.1} parent=60 // loop_exit
            _
        $region61: #{mnist_nn_forward.1} parent=52 // pred_fallthru
          _
      $region53: #{mnist_nn_forward.1} parent=48 // pred_fallthru
        _
      %1048 = vnop
    $region49: #{mnist_nn_forward.1} parent=1 // pred_fallthru
      _
    // Predicated region
    $region80: #{mnist_nn_forward.1} parent=1 // pred_check
      _
    $region81: #{mnist_nn_forward.1} parent=1 // pred_check_branch
      %1050 = sbr.rel (0) target = $region83
    $region82: #{mnist_nn_forward.1} parent=1 // pred_region
      _
    $region83: #{mnist_nn_forward.1} parent=1 // pred_fallthru
      _
    %1051 = vsyncpa [#allocation3], 1
    %1052 = vsyncpa [#allocation5], 1
    %1053 = vsyncpa [#allocation8], 1

</llo_original>
